<compile_context>
chip_gen: v5e
topology: v5e:2x2
jax: 0.10.0
libtpu: 0.0.40
codegen_flags: <defaults>
</compile_context>

<pallas_src>
import jax
import jax.numpy as jnp
import numpy as np
from jax.experimental import pallas as pl
from jax.experimental.pallas import tpu as pltpu


# ---------------------------------------------------------------------------
# Fused kernel: per grid step, load BB graphs, compute degree normalization in
# VMEM, and run all GraphConvolution layers (hidden + fused mu||logvar head)
# with adj and the running activation resident in VMEM.
# ---------------------------------------------------------------------------
def _make_fused_kernel(n_layers, bb, n_nodes, normalize, use_bf16):
    N = n_nodes
    BB = bb

    def cast(v):
        return v.astype(jnp.bfloat16) if use_bf16 else v

    def kernel(*refs):
        adj_ref, ops_ref = refs[0], refs[1]
        out_ref = refs[2 + 2 * n_layers]

        # Collapse the per-step batch into the sublane axis (whole-tile reshape:
        # BB == 1, or N is a multiple of 8 - enforced by the wrapper).
        a = adj_ref[...].reshape(BB * N, N)          # (BB*N, N)  f32
        x = ops_ref[...].reshape(BB * N, -1)         # (BB*N, F0) f32

        if normalize:
            # ---- degree scales, derived from the VMEM-resident adjacency ----
            # rout[g*N + j] = 1/sqrt(rowsum_j): scales rows of the support
            # (natural orientation: cross-lane reduce -> (BB*N, 1)).
            rs = jnp.sum(a, axis=1, keepdims=True)
            rs = jnp.where(rs == 0.0, 1e-10, rs)           # torch zero-degree clamp (f32)
            rout = jax.lax.rsqrt(rs)
            # rin[g*N + i] = 1/sqrt(colsum_i): scales rows of (A @ .).  The
            # column sum is naturally lane-oriented; move it to sublane
            # orientation with an identity mask + cross-lane reduce (VPU/XLU
            # only - no transpose, no extra HBM traffic).
            row_i = jax.lax.broadcasted_iota(jnp.int32, (N, N), 0)
            col_i = jax.lax.broadcasted_iota(jnp.int32, (N, N), 1)
            eye = (row_i == col_i).astype(jnp.float32)     # (N, N)
            cols = []
            for g in range(BB):
                ag = a[g * N:(g + 1) * N, :]                              # (N, N)
                cs_lane = jnp.sum(ag, axis=0, keepdims=True)              # (1, N)
                cols.append(jnp.sum(eye * cs_lane, axis=1, keepdims=True))  # (N, 1)
            cs = cols[0] if BB == 1 else jnp.concatenate(cols, axis=0)   # (BB*N, 1)
            cs = jnp.where(cs == 0.0, 1e-10, cs)
            rin = jax.lax.rsqrt(cs)
        else:
            rout = rin = None

        # Adjacency cast once for the MXU; never rescaled / copied in f32.
        a_mm = cast(a)

        for li in range(n_layers):
            wt = refs[2 + 2 * li][...]       # (Fin, Fout)  pre-transposed weight
            b = refs[3 + 2 * li][...]        # (1, Fout)
            fin, fout = wt.shape

            # Fold D_out into the activations (row scaling commutes with @ W).
            xs = x * rout if normalize else x
            w_mm = cast(wt)

            if fin <= fout:
                # Block-diagonal adjacency matmuls first, then ONE tall weight matmul.
                xs_mm = cast(xs)
                parts = [
                    jnp.dot(a_mm[g * N:(g + 1) * N, :],
                            xs_mm[g * N:(g + 1) * N, :],
                            preferred_element_type=jnp.float32)
                    for g in range(BB)
                ]
                ax = parts[0] if BB == 1 else jnp.concatenate(parts, axis=0)
                z = jnp.dot(cast(ax), w_mm, preferred_element_type=jnp.float32)
            else:
                # Tall weight matmul first, then per-graph adjacency matmuls.
                xw = jnp.dot(cast(xs), w_mm, preferred_element_type=jnp.float32)
                xw_mm = cast(xw)
                parts = [
                    jnp.dot(a_mm[g * N:(g + 1) * N, :],
                            xw_mm[g * N:(g + 1) * N, :],
                            preferred_element_type=jnp.float32)
                    for g in range(BB)
                ]
                z = parts[0] if BB == 1 else jnp.concatenate(parts, axis=0)

            if normalize:
                z = z * rin                    # fold D_in into the product (f32)
            x = jnp.maximum(z, 0.0) + b        # ReLU, then bias (torch order)

        out_ref[...] = x.reshape(out_ref.shape).astype(out_ref.dtype)

    return kernel


# ---------------------------------------------------------------------------
# Parameter init (mirrors torch kaiming_uniform_ + uniform bias) and packing.
# ---------------------------------------------------------------------------
def init_gc_params(key, fin, fout):
    kw, kb = jax.random.split(key)
    bound = float(np.sqrt(6.0 / fin))              # kaiming_uniform_ (a=0) bound
    w = jax.random.uniform(kw, (fout, fin), jnp.float32, -bound, bound)
    stdv = 1.0 / float(np.sqrt(fin))
    b = jax.random.uniform(kb, (fout,), jnp.float32, -stdv, stdv)
    return w, b


def init_vaencoder_params(key, dims):
    n_gcs = len(dims) - 1
    keys = jax.random.split(key, n_gcs + 2)
    gcs = [init_gc_params(keys[k], dims[k], dims[k + 1]) for k in range(n_gcs)]
    mu = init_gc_params(keys[-2], dims[-2], dims[-1])
    logvar = init_gc_params(keys[-1], dims[-2], dims[-1])
    return {"gcs": gcs, "mu": mu, "logvar": logvar}


def pack_params(raw, dims, lane_multiple=128):
    """Pre-transpose hidden weights, fuse mu||logvar, zero-pad head to 128 lanes."""
    layers = []
    for (w, b) in raw["gcs"][:-1]:                     # torch forward skips the last gc
        layers.append((w.T, b.reshape(1, -1)))         # (Fin, Fout), (1, Fout)
    w_mu, b_mu = raw["mu"]
    w_lv, b_lv = raw["logvar"]
    w_head = jnp.concatenate([w_mu, w_lv], axis=0)     # (2*latent, Fin)
    b_head = jnp.concatenate([b_mu, b_lv], axis=0)     # (2*latent,)
    two_l = w_head.shape[0]
    fp = ((two_l + lane_multiple - 1) // lane_multiple) * lane_multiple
    pad = fp - two_l
    if pad:
        # Zero columns: relu(adj @ (x @ 0)) + 0 == 0, sliced off after the call.
        w_head = jnp.concatenate(
            [w_head, jnp.zeros((pad, w_head.shape[1]), w_head.dtype)], axis=0)
        b_head = jnp.concatenate([b_head, jnp.zeros((pad,), b_head.dtype)], axis=0)
    layers.append((w_head.T, b_head.reshape(1, -1)))   # (Fin, Fp), (1, Fp)
    return {"layers": layers, "latent": int(dims[-1]), "head_width": int(fp)}


def _choose_block_batch(B, N, f_max, itemsize=4, vmem_block_budget=8 << 20):
    """Largest BB dividing B s.t. grid extent stays >= 2 and the block fits a
    conservative VMEM budget; BB > 1 only when N is a multiple of 8 (whole-tile
    reshapes)."""
    if B <= 1 or N % 8 != 0:
        return 1
    best = 1
    for cand in range(1, B + 1):
        if B % cand != 0:
            continue
        if B // cand < 2:                      # keep both v7x TensorCores busy
            continue
        block_bytes = cand * (N * N + 2 * N * f_max) * itemsize
        if block_bytes > vmem_block_budget:
            continue
        best = cand
    return best


# ---------------------------------------------------------------------------
# Forward: one fused pallas_call over a parallel grid of BB-graph blocks.
# ---------------------------------------------------------------------------
def vaencoder_forward(packed, ops, adj, normalize=True, use_bf16_matmul=True,
                      block_batch=None):
    B, N, F0 = ops.shape
    layers = packed["layers"]
    latent = packed["latent"]
    n_layers = len(layers)
    fp = layers[-1][0].shape[1]                         # padded head width (>= 128)

    f_max = max([F0] + [w.shape[0] for w, _ in layers] + [w.shape[1] for w, _ in layers])
    BB = block_batch if block_batch is not None else _choose_block_batch(B, N, f_max)
    assert B % BB == 0

    kernel = _make_fused_kernel(n_layers, BB, N, normalize, use_bf16_matmul)

    in_specs = [
        pl.BlockSpec((BB, N, N), lambda i: (i, 0, 0)),      # adj (read once per step)
        pl.BlockSpec((BB, N, F0), lambda i: (i, 0, 0)),     # ops
    ]
    args = [adj, ops]
    for (wt, bb_) in layers:
        fin, fout = wt.shape
        in_specs.append(pl.BlockSpec((fin, fout), lambda i: (0, 0)))
        in_specs.append(pl.BlockSpec((1, fout), lambda i: (0, 0)))
        args.append(wt)
        args.append(bb_)

    out = pl.pallas_call(
        kernel,
        out_shape=jax.ShapeDtypeStruct((B, N, fp), jnp.float32),
        grid=(B // BB,),
        in_specs=in_specs,
        out_specs=pl.BlockSpec((BB, N, fp), lambda i: (i, 0, 0)),
        compiler_params=pltpu.CompilerParams(
            dimension_semantics=("parallel",),          # shard blocks across TCs
            vmem_limit_bytes=48 * 1024 * 1024,          # fits v7x, raises v5e/v6e cap
        ),
    )(*args)

    mu = out[..., :latent]
    logvar = out[..., latent:2 * latent]
    return mu, logvar


# ---------------------------------------------------------------------------
# Pure-JAX reference (mirrors the PyTorch module) for correctness check.
# ---------------------------------------------------------------------------
def ref_forward(raw, ops, adj, normalize=True):
    if normalize:
        s1 = adj.sum(axis=1)
        s2 = adj.sum(axis=2)
        s1 = jnp.where(s1 == 0, 1e-10, s1)
        s2 = jnp.where(s2 == 0, 1e-10, s2)
        adj = adj * (1.0 / jnp.sqrt(s1))[:, :, None] * (1.0 / jnp.sqrt(s2))[:, None, :]

    def gc(x, w, b):
        support = jnp.einsum("bnf,of->bno", x, w)
        return jnp.maximum(jnp.einsum("bnm,bmo->bno", adj, support), 0.0) + b

    x = ops
    for (w, b) in raw["gcs"][:-1]:
        x = gc(x, w, b)
    return gc(x, *raw["mu"]), gc(x, *raw["logvar"])


if __name__ == "__main__":
    key = jax.random.PRNGKey(0)
    k_ops, k_adj, k_par = jax.random.split(key, 3)

    B, N = 4, 8
    dims = [4, 32, 16]   # in_features -> hidden -> latent

    ops = jax.random.normal(k_ops, (B, N, dims[0]), jnp.float32)
    adj = (jax.random.uniform(k_adj, (B, N, N)) > 0.5).astype(jnp.float32)

    raw = init_vaencoder_params(k_par, dims)
    packed = pack_params(raw, dims)

    mu_ref, logvar_ref = ref_forward(raw, ops, adj, normalize=True)

    # Default path: bf16 MXU operands, f32 accumulation (recommended on v6e/v7x).
    mu, logvar = vaencoder_forward(packed, ops, adj, normalize=True)
    jax.block_until_ready((mu, logvar))
    assert mu.shape == (B, N, dims[-1]) and logvar.shape == (B, N, dims[-1])
    assert np.allclose(np.asarray(mu), np.asarray(mu_ref), atol=1e-1, rtol=2e-2)
    assert np.allclose(np.asarray(logvar), np.asarray(logvar_ref), atol=1e-1, rtol=2e-2)

    # Strict-parity f32 path.
    mu32, lv32 = vaencoder_forward(packed, ops, adj, normalize=True,
                                   use_bf16_matmul=False)
    jax.block_until_ready((mu32, lv32))
    assert np.allclose(np.asarray(mu32), np.asarray(mu_ref), atol=2e-4, rtol=2e-4)
    assert np.allclose(np.asarray(lv32), np.asarray(logvar_ref), atol=2e-4, rtol=2e-4)

    print("KERNEL_OK")
</pallas_src>

<mosaic_0001>
module attributes {stable_mosaic.version = 11 : i64} {
  func.func @kernel(%arg0: i32, %arg1: memref<2x8x8xf32, #tpu.memory_space<vmem>>, %arg2: memref<2x8x4xf32, #tpu.memory_space<vmem>>, %arg3: memref<4x32xf32, #tpu.memory_space<vmem>>, %arg4: memref<1x32xf32, #tpu.memory_space<vmem>>, %arg5: memref<32x128xf32, #tpu.memory_space<vmem>>, %arg6: memref<1x128xf32, #tpu.memory_space<vmem>>, %arg7: memref<2x8x128xf32, #tpu.memory_space<vmem>>) attributes {dimension_semantics = [#tpu.dimension_semantics<parallel>], iteration_bounds = array<i64: 2>, scalar_prefetch = 0 : i64, scratch_operands = 0 : i64, tpu.core_type = #tpu.core_type<tc>, window_params = [{transform_indices = @transform_0, window_bounds = array<i64: 2, 8, 8>}, {transform_indices = @transform_1, window_bounds = array<i64: 2, 8, 4>}, {pipeline_mode = #tpu.pipeline_mode<synchronous>, transform_indices = @transform_2, window_bounds = array<i64: 4, 32>}, {pipeline_mode = #tpu.pipeline_mode<synchronous>, transform_indices = @transform_3, window_bounds = array<i64: 1, 32>}, {pipeline_mode = #tpu.pipeline_mode<synchronous>, transform_indices = @transform_4, window_bounds = array<i64: 32, 128>}, {pipeline_mode = #tpu.pipeline_mode<synchronous>, transform_indices = @transform_5, window_bounds = array<i64: 1, 128>}, {transform_indices = @transform_6, window_bounds = array<i64: 2, 8, 128>}]} {
    %c0 = arith.constant 0 : index
    %c0_0 = arith.constant 0 : index
    %c0_1 = arith.constant 0 : index
    %0 = vector.load %arg1[%c0, %c0_0, %c0_1] : memref<2x8x8xf32, #tpu.memory_space<vmem>>, vector<2x8x8xf32>
    %1 = vector.shape_cast %0 : vector<2x8x8xf32> to vector<16x8xf32>
    %c0_2 = arith.constant 0 : index
    %c0_3 = arith.constant 0 : index
    %c0_4 = arith.constant 0 : index
    %2 = vector.load %arg2[%c0_2, %c0_3, %c0_4] : memref<2x8x4xf32, #tpu.memory_space<vmem>>, vector<2x8x4xf32>
    %3 = vector.shape_cast %2 : vector<2x8x4xf32> to vector<16x4xf32>
    %cst = arith.constant dense<0.000000e+00> : vector<16xf32>
    %4 = vector.multi_reduction <add>, %1, %cst [1] : vector<16x8xf32> to vector<16xf32>
    %5 = vector.shape_cast %4 : vector<16xf32> to vector<16x1xf32>
    %cst_5 = arith.constant 0.000000e+00 : f32
    %6 = vector.broadcast %cst_5 : f32 to vector<16x1xf32>
    %7 = arith.cmpf oeq, %5, %6 : vector<16x1xf32>
    %cst_6 = arith.constant 1.000000e-10 : f32
    %8 = vector.broadcast %cst_6 : f32 to vector<16x1xf32>
    %9 = arith.select %7, %8, %5 : vector<16x1xi1>, vector<16x1xf32>
    %10 = math.rsqrt %9 : vector<16x1xf32>
    %11 = tpu.iota {dimensions = array<i32: 0>} : vector<8x8xi32>
    %12 = tpu.iota {dimensions = array<i32: 1>} : vector<8x8xi32>
    %13 = arith.cmpi eq, %11, %12 : vector<8x8xi32>
    %14 = arith.extui %13 : vector<8x8xi1> to vector<8x8xi32>
    %15 = arith.sitofp %14 : vector<8x8xi32> to vector<8x8xf32>
    %16 = vector.extract_strided_slice %1 {offsets = [0, 0], sizes = [8, 8], strides = [1, 1]} : vector<16x8xf32> to vector<8x8xf32>
    %cst_7 = arith.constant dense<0.000000e+00> : vector<8xf32>
    %17 = vector.multi_reduction <add>, %16, %cst_7 [0] : vector<8x8xf32> to vector<8xf32>
    %18 = vector.shape_cast %17 : vector<8xf32> to vector<1x8xf32>
    %19 = vector.broadcast %18 : vector<1x8xf32> to vector<8x8xf32>
    %20 = arith.mulf %15, %19 : vector<8x8xf32>
    %cst_8 = arith.constant dense<0.000000e+00> : vector<8xf32>
    %21 = vector.multi_reduction <add>, %20, %cst_8 [1] : vector<8x8xf32> to vector<8xf32>
    %22 = vector.shape_cast %21 : vector<8xf32> to vector<8x1xf32>
    %23 = vector.extract_strided_slice %1 {offsets = [8, 0], sizes = [8, 8], strides = [1, 1]} : vector<16x8xf32> to vector<8x8xf32>
    %cst_9 = arith.constant dense<0.000000e+00> : vector<8xf32>
    %24 = vector.multi_reduction <add>, %23, %cst_9 [0] : vector<8x8xf32> to vector<8xf32>
    %25 = vector.shape_cast %24 : vector<8xf32> to vector<1x8xf32>
    %26 = vector.broadcast %25 : vector<1x8xf32> to vector<8x8xf32>
    %27 = arith.mulf %15, %26 : vector<8x8xf32>
    %cst_10 = arith.constant dense<0.000000e+00> : vector<8xf32>
    %28 = vector.multi_reduction <add>, %27, %cst_10 [1] : vector<8x8xf32> to vector<8xf32>
    %29 = vector.shape_cast %28 : vector<8xf32> to vector<8x1xf32>
    %30 = tpu.concatenate %22, %29 in 0 : vector<8x1xf32>, vector<8x1xf32> -> vector<16x1xf32>
    %cst_11 = arith.constant 0.000000e+00 : f32
    %31 = vector.broadcast %cst_11 : f32 to vector<16x1xf32>
    %32 = arith.cmpf oeq, %30, %31 : vector<16x1xf32>
    %cst_12 = arith.constant 1.000000e-10 : f32
    %33 = vector.broadcast %cst_12 : f32 to vector<16x1xf32>
    %34 = arith.select %32, %33, %30 : vector<16x1xi1>, vector<16x1xf32>
    %35 = math.rsqrt %34 : vector<16x1xf32>
    %36 = arith.truncf %1 : vector<16x8xf32> to vector<16x8xbf16>
    %c0_13 = arith.constant 0 : index
    %c0_14 = arith.constant 0 : index
    %37 = vector.load %arg3[%c0_13, %c0_14] : memref<4x32xf32, #tpu.memory_space<vmem>>, vector<4x32xf32>
    %c0_15 = arith.constant 0 : index
    %c0_16 = arith.constant 0 : index
    %38 = vector.load %arg4[%c0_15, %c0_16] : memref<1x32xf32, #tpu.memory_space<vmem>>, vector<1x32xf32>
    %39 = vector.broadcast %10 : vector<16x1xf32> to vector<16x4xf32>
    %40 = arith.mulf %3, %39 : vector<16x4xf32>
    %41 = arith.truncf %37 : vector<4x32xf32> to vector<4x32xbf16>
    %42 = arith.truncf %40 : vector<16x4xf32> to vector<16x4xbf16>
    %43 = vector.extract_strided_slice %36 {offsets = [0, 0], sizes = [8, 8], strides = [1, 1]} : vector<16x8xbf16> to vector<8x8xbf16>
    %44 = vector.extract_strided_slice %42 {offsets = [0, 0], sizes = [8, 4], strides = [1, 1]} : vector<16x4xbf16> to vector<8x4xbf16>
    %cst_17 = arith.constant dense<0.000000e+00> : vector<8x4xf32>
    %45 = tpu.matmul %43, %44, %cst_17 {dimension_numbers = #tpu.dot_dimension_numbers<[1], [0], [0], [1], [0, 0, 1, 1], [], []>} : vector<8x8xbf16>, vector<8x4xbf16>, vector<8x4xf32> -> vector<8x4xf32>
    %46 = vector.extract_strided_slice %36 {offsets = [8, 0], sizes = [8, 8], strides = [1, 1]} : vector<16x8xbf16> to vector<8x8xbf16>
    %47 = vector.extract_strided_slice %42 {offsets = [8, 0], sizes = [8, 4], strides = [1, 1]} : vector<16x4xbf16> to vector<8x4xbf16>
    %cst_18 = arith.constant dense<0.000000e+00> : vector<8x4xf32>
    %48 = tpu.matmul %46, %47, %cst_18 {dimension_numbers = #tpu.dot_dimension_numbers<[1], [0], [0], [1], [0, 0, 1, 1], [], []>} : vector<8x8xbf16>, vector<8x4xbf16>, vector<8x4xf32> -> vector<8x4xf32>
    %49 = tpu.concatenate %45, %48 in 0 : vector<8x4xf32>, vector<8x4xf32> -> vector<16x4xf32>
    %50 = arith.truncf %49 : vector<16x4xf32> to vector<16x4xbf16>
    %cst_19 = arith.constant dense<0.000000e+00> : vector<16x32xf32>
    %51 = tpu.matmul %50, %41, %cst_19 {dimension_numbers = #tpu.dot_dimension_numbers<[1], [0], [0], [1], [0, 0, 1, 1], [], []>} : vector<16x4xbf16>, vector<4x32xbf16>, vector<16x32xf32> -> vector<16x32xf32>
    %52 = vector.broadcast %35 : vector<16x1xf32> to vector<16x32xf32>
    %53 = arith.mulf %51, %52 : vector<16x32xf32>
    %cst_20 = arith.constant 0.000000e+00 : f32
    %54 = vector.broadcast %cst_20 : f32 to vector<16x32xf32>
    %55 = arith.maximumf %53, %54 : vector<16x32xf32>
    %56 = vector.broadcast %38 : vector<1x32xf32> to vector<16x32xf32>
    %57 = arith.addf %55, %56 : vector<16x32xf32>
    %c0_21 = arith.constant 0 : index
    %c0_22 = arith.constant 0 : index
    %58 = vector.load %arg5[%c0_21, %c0_22] : memref<32x128xf32, #tpu.memory_space<vmem>>, vector<32x128xf32>
    %c0_23 = arith.constant 0 : index
    %c0_24 = arith.constant 0 : index
    %59 = vector.load %arg6[%c0_23, %c0_24] : memref<1x128xf32, #tpu.memory_space<vmem>>, vector<1x128xf32>
    %60 = vector.broadcast %10 : vector<16x1xf32> to vector<16x32xf32>
    %61 = arith.mulf %57, %60 : vector<16x32xf32>
    %62 = arith.truncf %58 : vector<32x128xf32> to vector<32x128xbf16>
    %63 = arith.truncf %61 : vector<16x32xf32> to vector<16x32xbf16>
    %64 = vector.extract_strided_slice %36 {offsets = [0, 0], sizes = [8, 8], strides = [1, 1]} : vector<16x8xbf16> to vector<8x8xbf16>
    %65 = vector.extract_strided_slice %63 {offsets = [0, 0], sizes = [8, 32], strides = [1, 1]} : vector<16x32xbf16> to vector<8x32xbf16>
    %cst_25 = arith.constant dense<0.000000e+00> : vector<8x32xf32>
    %66 = tpu.matmul %64, %65, %cst_25 {dimension_numbers = #tpu.dot_dimension_numbers<[1], [0], [0], [1], [0, 0, 1, 1], [], []>} : vector<8x8xbf16>, vector<8x32xbf16>, vector<8x32xf32> -> vector<8x32xf32>
    %67 = vector.extract_strided_slice %36 {offsets = [8, 0], sizes = [8, 8], strides = [1, 1]} : vector<16x8xbf16> to vector<8x8xbf16>
    %68 = vector.extract_strided_slice %63 {offsets = [8, 0], sizes = [8, 32], strides = [1, 1]} : vector<16x32xbf16> to vector<8x32xbf16>
    %cst_26 = arith.constant dense<0.000000e+00> : vector<8x32xf32>
    %69 = tpu.matmul %67, %68, %cst_26 {dimension_numbers = #tpu.dot_dimension_numbers<[1], [0], [0], [1], [0, 0, 1, 1], [], []>} : vector<8x8xbf16>, vector<8x32xbf16>, vector<8x32xf32> -> vector<8x32xf32>
    %70 = tpu.concatenate %66, %69 in 0 : vector<8x32xf32>, vector<8x32xf32> -> vector<16x32xf32>
    %71 = arith.truncf %70 : vector<16x32xf32> to vector<16x32xbf16>
    %cst_27 = arith.constant dense<0.000000e+00> : vector<16x128xf32>
    %72 = tpu.matmul %71, %62, %cst_27 {dimension_numbers = #tpu.dot_dimension_numbers<[1], [0], [0], [1], [0, 0, 1, 1], [], []>} : vector<16x32xbf16>, vector<32x128xbf16>, vector<16x128xf32> -> vector<16x128xf32>
    %73 = vector.broadcast %35 : vector<16x1xf32> to vector<16x128xf32>
    %74 = arith.mulf %72, %73 : vector<16x128xf32>
    %cst_28 = arith.constant 0.000000e+00 : f32
    %75 = vector.broadcast %cst_28 : f32 to vector<16x128xf32>
    %76 = arith.maximumf %74, %75 : vector<16x128xf32>
    %77 = vector.broadcast %59 : vector<1x128xf32> to vector<16x128xf32>
    %78 = arith.addf %76, %77 : vector<16x128xf32>
    %79 = vector.shape_cast %78 : vector<16x128xf32> to vector<2x8x128xf32>
    %c0_29 = arith.constant 0 : index
    %c0_30 = arith.constant 0 : index
    %c0_31 = arith.constant 0 : index
    %80 = vector.load %arg7[%c0_29, %c0_30, %c0_31] : memref<2x8x128xf32, #tpu.memory_space<vmem>>, vector<2x8x128xf32>
    tpu.vector_store %arg7[%c0_29, %c0_30, %c0_31], %79 {strides = array<i32>} : memref<2x8x128xf32, #tpu.memory_space<vmem>>, vector<2x8x128xf32>,
    return
  }
  func.func @transform_0(%arg0: i32) -> (i32, i32, i32) {
    %c0_i32 = arith.constant 0 : i32
    %c0_i32_0 = arith.constant 0 : i32
    %c0_i32_1 = arith.constant 0 : i32
    return %arg0, %c0_i32, %c0_i32_0 : i32, i32, i32
  }
  func.func @transform_1(%arg0: i32) -> (i32, i32, i32) {
    %c0_i32 = arith.constant 0 : i32
    %c0_i32_0 = arith.constant 0 : i32
    %c0_i32_1 = arith.constant 0 : i32
    return %arg0, %c0_i32, %c0_i32_0 : i32, i32, i32
  }
  func.func @transform_2(%arg0: i32) -> (i32, i32) {
    %c0_i32 = arith.constant 0 : i32
    %c0_i32_0 = arith.constant 0 : i32
    %c0_i32_1 = arith.constant 0 : i32
    return %c0_i32, %c0_i32_0 : i32, i32
  }
  func.func @transform_3(%arg0: i32) -> (i32, i32) {
    %c0_i32 = arith.constant 0 : i32
    %c0_i32_0 = arith.constant 0 : i32
    %c0_i32_1 = arith.constant 0 : i32
    return %c0_i32, %c0_i32_0 : i32, i32
  }
  func.func @transform_4(%arg0: i32) -> (i32, i32) {
    %c0_i32 = arith.constant 0 : i32
    %c0_i32_0 = arith.constant 0 : i32
    %c0_i32_1 = arith.constant 0 : i32
    return %c0_i32, %c0_i32_0 : i32, i32
  }
  func.func @transform_5(%arg0: i32) -> (i32, i32) {
    %c0_i32 = arith.constant 0 : i32
    %c0_i32_0 = arith.constant 0 : i32
    %c0_i32_1 = arith.constant 0 : i32
    return %c0_i32, %c0_i32_0 : i32, i32
  }
  func.func @transform_6(%arg0: i32) -> (i32, i32, i32) {
    %c0_i32 = arith.constant 0 : i32
    %c0_i32_0 = arith.constant 0 : i32
    %c0_i32_1 = arith.constant 0 : i32
    return %arg0, %c0_i32, %c0_i32_0 : i32, i32, i32
  }
}

</mosaic_0001>

<llo_original>
// kernel: tpu_custom_call.1
$region0: #{tpu_custom_call.1}
  #allocation0 [shape = 'u32[]', space=smem, size = 0x4, offset = 0x4, fixed_abs, tag = 'smem constant byte address 0x4 - core index']
  #allocation1 [shape = 'u32[72,128]{1,0:T(1,128)}', space=vmem, size = 0x9000, scoped, tag = 'internal scratch']
  %s0 = inlined_call_operand.vmem [shape: f32[4,8,8], index: 0, kind: input, shape index: {}]
  %s1 = inlined_call_operand.vmem [shape: f32[4,8,4], index: 1, kind: input, shape index: {}]
  %s2 = inlined_call_operand.vmem [shape: f32[4,32], index: 2, kind: input, shape index: {}]
  %s3 = inlined_call_operand.vmem [shape: f32[1,32], index: 3, kind: input, shape index: {}]
  %s4 = inlined_call_operand.hbm [shape: f32[32,128], index: 4, kind: input, shape index: {}]
  %s5 = inlined_call_operand.vmem [shape: f32[1,128], index: 5, kind: input, shape index: {}]
  %s6 = inlined_call_operand.hbm [shape: f32[4,8,128], index: 6, kind: output, shape index: {}]
  %s7 = sld [smem:[#allocation0]]
  $region61: #{tpu_custom_call.1} parent=0
    _
  %s9 = ssub.s32 1, %s7
  %s10 = scalar_select 0, %s9, %s7
  $region1: #{tpu_custom_call.1} parent=0
    #allocation2 [shape = 'u8[16384]{0}', space=vmem, size = 0x4000, scoped, tag = 'input window, operand 4, single buffered']
    #allocation3 [shape = 's32[2]{0}', space=sflag, size = 0x8, scoped, tag = 'scoped memory for tpu_custom_call.1']
    #allocation4 [shape = 's32[2]{0}', space=sflag, size = 0x8, scoped, tag = 'scoped memory for tpu_custom_call.1']
    #allocation5 [shape = 'u8[16384]{0}', space=vmem, size = 0x4000, scoped, tag = 'output window, operand 0']
    %11 = vsyncpa [#allocation3], 0
    %12 = vsyncpa [#allocation4], 0
    %s13 = scalar_lea.sflag [#allocation4], 1
    %14 = vsyncpa %s13, 0
    loop: start=0, step=1, limit=4
    $region2: #{tpu_custom_call.1} parent=1 // loop_pre_header
      _
    $region3: #{tpu_custom_call.1} parent=1 // loop_header
      %s16 = sphi 0, %s20
      %p17 = scmp.ge.s32.totalorder %s16, 4
      %s26 = sphi 0, %s28
      %s29 = sphi 0, %s26
      %s30 = sphi 0, %s29
      %s46 = sphi 0, %s30
      %s52 = sphi 0, %s54
      %s55 = sphi 0, %s52
      %s56 = sphi 0, %s55
      %s72 = sphi 0, %s56
      %s76 = sphi 0, %s76
      %s78 = sphi 0, %s76
      %s79 = sphi 0, %s78
      %s93 = sphi 0, %s79
      %s97 = sphi 0, %s97
      %s99 = sphi 0, %s97
      %s100 = sphi 0, %s99
      %s114 = sphi 0, %s100
      %s118 = sphi 0, %s118
      %s120 = sphi 0, %s118
      %s121 = sphi 0, %s120
      %s135 = sphi 0, %s121
      %s139 = sphi 0, %s139
      %s141 = sphi 0, %s139
      %s142 = sphi 0, %s141
      %s156 = sphi 0, %s142
      %s162 = sphi 0, %s164
      %s165 = sphi 0, %s162
      %s166 = sphi 0, %s165
      %s182 = sphi 0, %s166
    $region4: #{tpu_custom_call.1} parent=1 // loop_header_branch
      %19 = sbr.rel (%p17) target = $region8
    $region5: #{tpu_custom_call.1} parent=1 // loop_body
      %s21 = ssub.s32 %s16, 1
      %s22 = ssub.s32 %s16, 2
      %s23 = sadd.s32 %s16, 1
      %s24 = ssub.s32 %s16, %s23
      %p25 = scmp.eq.s32.totalorder %s24, 0
      %s27 = sadd.s32 %s26, 1
      %s28 = scalar_select %p25, %s26, %s27
      %p31 = pneg %p25
      %p32 = scmp.eq.s32.totalorder %s16, 1
      %p33 = por %p31, %p32
      %p34 = scmp.ne.s32.totalorder %s26, %s29
      %p35 = scmp.eq.s32.totalorder %s16, 0
      %p36 = por %p34, %p35
      %p37 = scmp.ne.s32.totalorder %s26, %s29
      %p38 = scmp.eq.s32.totalorder %s21, 1
      %p39 = por %p37, %p38
      %p40 = scmp.ne.s32.totalorder %s29, %s30
      %p41 = scmp.eq.s32.totalorder %s21, 0
      %p42 = por %p40, %p41
      %p43 = scmp.ne.s32.totalorder %s29, %s30
      %p44 = scmp.eq.s32.totalorder %s22, 1
      %p45 = por %p43, %p44
      %p47 = scmp.ne.s32.totalorder %s30, %s46
      %p48 = scmp.eq.s32.totalorder %s22, 0
      %p49 = por %p47, %p48
      %s50 = ssub.s32 %s16, %s23
      %p51 = scmp.eq.s32.totalorder %s50, 0
      %s53 = sadd.s32 %s52, 1
      %s54 = scalar_select %p51, %s52, %s53
      %p57 = pneg %p51
      %p58 = scmp.eq.s32.totalorder %s16, 1
      %p59 = por %p57, %p58
      %p60 = scmp.ne.s32.totalorder %s52, %s55
      %p61 = scmp.eq.s32.totalorder %s16, 0
      %p62 = por %p60, %p61
      %p63 = scmp.ne.s32.totalorder %s52, %s55
      %p64 = scmp.eq.s32.totalorder %s21, 1
      %p65 = por %p63, %p64
      %p66 = scmp.ne.s32.totalorder %s55, %s56
      %p67 = scmp.eq.s32.totalorder %s21, 0
      %p68 = por %p66, %p67
      %p69 = scmp.ne.s32.totalorder %s55, %s56
      %p70 = scmp.eq.s32.totalorder %s22, 1
      %p71 = por %p69, %p70
      %p73 = scmp.ne.s32.totalorder %s56, %s72
      %p74 = scmp.eq.s32.totalorder %s22, 0
      %p75 = por %p73, %p74
      %s77 = sadd.s32 %s76, 1
      %p80 = scmp.eq.s32.totalorder %s16, 1
      %p81 = scmp.ne.s32.totalorder %s76, %s78
      %p82 = scmp.eq.s32.totalorder %s16, 0
      %p83 = por %p81, %p82
      %p84 = scmp.ne.s32.totalorder %s76, %s78
      %p85 = scmp.eq.s32.totalorder %s21, 1
      %p86 = por %p84, %p85
      %p87 = scmp.ne.s32.totalorder %s78, %s79
      %p88 = scmp.eq.s32.totalorder %s21, 0
      %p89 = por %p87, %p88
      %p90 = scmp.ne.s32.totalorder %s78, %s79
      %p91 = scmp.eq.s32.totalorder %s22, 1
      %p92 = por %p90, %p91
      %p94 = scmp.ne.s32.totalorder %s79, %s93
      %p95 = scmp.eq.s32.totalorder %s22, 0
      %p96 = por %p94, %p95
      %s98 = sadd.s32 %s97, 1
      %p101 = scmp.eq.s32.totalorder %s16, 1
      %p102 = scmp.ne.s32.totalorder %s97, %s99
      %p103 = scmp.eq.s32.totalorder %s16, 0
      %p104 = por %p102, %p103
      %p105 = scmp.ne.s32.totalorder %s97, %s99
      %p106 = scmp.eq.s32.totalorder %s21, 1
      %p107 = por %p105, %p106
      %p108 = scmp.ne.s32.totalorder %s99, %s100
      %p109 = scmp.eq.s32.totalorder %s21, 0
      %p110 = por %p108, %p109
      %p111 = scmp.ne.s32.totalorder %s99, %s100
      %p112 = scmp.eq.s32.totalorder %s22, 1
      %p113 = por %p111, %p112
      %p115 = scmp.ne.s32.totalorder %s100, %s114
      %p116 = scmp.eq.s32.totalorder %s22, 0
      %p117 = por %p115, %p116
      %s119 = sadd.s32 %s118, 1
      %p122 = scmp.eq.s32.totalorder %s16, 1
      %p123 = scmp.ne.s32.totalorder %s118, %s120
      %p124 = scmp.eq.s32.totalorder %s16, 0
      %p125 = por %p123, %p124
      %p126 = scmp.ne.s32.totalorder %s118, %s120
      %p127 = scmp.eq.s32.totalorder %s21, 1
      %p128 = por %p126, %p127
      %p129 = scmp.ne.s32.totalorder %s120, %s121
      %p130 = scmp.eq.s32.totalorder %s21, 0
      %p131 = por %p129, %p130
      %p132 = scmp.ne.s32.totalorder %s120, %s121
      %p133 = scmp.eq.s32.totalorder %s22, 1
      %p134 = por %p132, %p133
      %p136 = scmp.ne.s32.totalorder %s121, %s135
      %p137 = scmp.eq.s32.totalorder %s22, 0
      %p138 = por %p136, %p137
      %s140 = sadd.s32 %s139, 1
      %p143 = scmp.eq.s32.totalorder %s16, 1
      %p144 = scmp.ne.s32.totalorder %s139, %s141
      %p145 = scmp.eq.s32.totalorder %s16, 0
      %p146 = por %p144, %p145
      %p147 = scmp.ne.s32.totalorder %s139, %s141
      %p148 = scmp.eq.s32.totalorder %s21, 1
      %p149 = por %p147, %p148
      %p150 = scmp.ne.s32.totalorder %s141, %s142
      %p151 = scmp.eq.s32.totalorder %s21, 0
      %p152 = por %p150, %p151
      %p153 = scmp.ne.s32.totalorder %s141, %s142
      %p154 = scmp.eq.s32.totalorder %s22, 1
      %p155 = por %p153, %p154
      %p157 = scmp.ne.s32.totalorder %s142, %s156
      %p158 = scmp.eq.s32.totalorder %s22, 0
      %p159 = por %p157, %p158
      %s160 = ssub.s32 %s16, %s23
      %p161 = scmp.eq.s32.totalorder %s160, 0
      %s163 = sadd.s32 %s162, 1
      %s164 = scalar_select %p161, %s162, %s163
      %p167 = pneg %p161
      %p168 = scmp.eq.s32.totalorder %s16, 1
      %p169 = por %p167, %p168
      %p170 = scmp.ne.s32.totalorder %s162, %s165
      %p171 = scmp.eq.s32.totalorder %s16, 0
      %p172 = por %p170, %p171
      %p173 = scmp.ne.s32.totalorder %s162, %s165
      %p174 = scmp.eq.s32.totalorder %s21, 1
      %p175 = por %p173, %p174
      %p176 = scmp.ne.s32.totalorder %s165, %s166
      %p177 = scmp.eq.s32.totalorder %s21, 0
      %p178 = por %p176, %p177
      %p179 = scmp.ne.s32.totalorder %s165, %s166
      %p180 = scmp.eq.s32.totalorder %s22, 1
      %p181 = por %p179, %p180
      %p183 = scmp.ne.s32.totalorder %s166, %s182
      %p184 = scmp.eq.s32.totalorder %s22, 0
      %p185 = por %p183, %p184
      %p186 = scmp.le.s32.totalorder 1, %s16
      %p187 = scmp.lt.s32.totalorder %s16, 3
      %p188 = pnand %p186, %p187
      %p189 = pneg %p188
      // Predicated region
      $region9: #{tpu_custom_call.1} parent=5 // pred_check
        _
      $region10: #{tpu_custom_call.1} parent=5 // pred_check_branch
        %191 = sbr.rel (%p188) target = $region12
      $region11: #{tpu_custom_call.1} parent=5 // pred_region
        %s192 = ssub.s32 %s16, 1
        // Predicated region
        $region13: #{tpu_custom_call.1} parent=11 // pred_check
          %p193 = pneg %p89
        $region14: #{tpu_custom_call.1} parent=11 // pred_check_branch
          %195 = sbr.rel (%p193) target = $region16
        $region15: #{tpu_custom_call.1} parent=11 // pred_region
          _
        $region16: #{tpu_custom_call.1} parent=11 // pred_fallthru
          _
        // Predicated region
        $region17: #{tpu_custom_call.1} parent=11 // pred_check
          %p196 = pneg %p110
        $region18: #{tpu_custom_call.1} parent=11 // pred_check_branch
          %198 = sbr.rel (%p196) target = $region20
        $region19: #{tpu_custom_call.1} parent=11 // pred_region
          _
        $region20: #{tpu_custom_call.1} parent=11 // pred_fallthru
          _
        // Predicated region
        $region21: #{tpu_custom_call.1} parent=11 // pred_check
          %p199 = pneg %p131
        $region22: #{tpu_custom_call.1} parent=11 // pred_check_branch
          %201 = sbr.rel (%p199) target = $region24
        $region23: #{tpu_custom_call.1} parent=11 // pred_region
          %203 = vsyncadd [#allocation3], 0
          %s204 = sshll.u32 %s4, 4
          %s205 = int_to_ptr.hbm [resolvable:$true] %s204
          %s206 = sshll.u32 [#allocation2], 4
          %s207 = int_to_ptr.vmem [resolvable:$true] %s206
          %212 = dma.hbm_to_vmem [thread:$0]  %s205, 512, %s207, [#allocation3], 128, 128, 8
        $region24: #{tpu_custom_call.1} parent=11 // pred_fallthru
          _
        // Predicated region
        $region25: #{tpu_custom_call.1} parent=11 // pred_check
          %p213 = pneg %p152
        $region26: #{tpu_custom_call.1} parent=11 // pred_check_branch
          %215 = sbr.rel (%p213) target = $region28
        $region27: #{tpu_custom_call.1} parent=11 // pred_region
          _
        $region28: #{tpu_custom_call.1} parent=11 // pred_fallthru
          _
      $region12: #{tpu_custom_call.1} parent=5 // pred_fallthru
        _
      %p216 = scmp.lt.s32.totalorder %s16, 2
      // Predicated region
      $region29: #{tpu_custom_call.1} parent=5 // pred_check
        %p217 = pneg %p216
      $region30: #{tpu_custom_call.1} parent=5 // pred_check_branch
        %219 = sbr.rel (%p217) target = $region32
      $region31: #{tpu_custom_call.1} parent=5 // pred_region
        // Predicated region
        $region33: #{tpu_custom_call.1} parent=31 // pred_check
          %p220 = pneg %p36
        $region34: #{tpu_custom_call.1} parent=31 // pred_check_branch
          %222 = sbr.rel (%p220) target = $region36
        $region35: #{tpu_custom_call.1} parent=31 // pred_region
          %s223 = smul.u32 2, %s16
          %p224 = scmp.lt.s32.totalorder %s223, 3
          %s225 = scalar_select %p224, %s223, 3
          %s226 = smul.addr %s225, 8
          %s227 = scalar_lea.vmem %s0, %s226
          %s228 = smul.u32 2, %s16
        $region36: #{tpu_custom_call.1} parent=31 // pred_fallthru
          _
        // Predicated region
        $region37: #{tpu_custom_call.1} parent=31 // pred_check
          %p229 = pneg %p62
        $region38: #{tpu_custom_call.1} parent=31 // pred_check_branch
          %231 = sbr.rel (%p229) target = $region40
        $region39: #{tpu_custom_call.1} parent=31 // pred_region
          %s232 = smul.u32 2, %s16
          %p233 = scmp.lt.s32.totalorder %s232, 3
          %s234 = scalar_select %p233, %s232, 3
          %s235 = smul.addr %s234, 8
          %s236 = scalar_lea.vmem %s1, %s235
          %s237 = smul.u32 2, %s16
        $region40: #{tpu_custom_call.1} parent=31 // pred_fallthru
          _
      $region32: #{tpu_custom_call.1} parent=5 // pred_fallthru
        _
      %p238 = scmp.le.s32.totalorder 1, %s16
      %p239 = scmp.lt.s32.totalorder %s16, 3
      %p240 = pnand %p238, %p239
      %p241 = pneg %p240
      // Predicated region
      $region41: #{tpu_custom_call.1} parent=5 // pred_check
        _
      $region42: #{tpu_custom_call.1} parent=5 // pred_check_branch
        %243 = sbr.rel (%p240) target = $region44
      $region43: #{tpu_custom_call.1} parent=5 // pred_region
        %s244 = ssub.s32 %s16, 1
        // Predicated region
        $region45: #{tpu_custom_call.1} parent=43 // pred_check
          %p245 = pneg %p131
        $region46: #{tpu_custom_call.1} parent=43 // pred_check_branch
          %247 = sbr.rel (%p245) target = $region48
        $region47: #{tpu_custom_call.1} parent=43 // pred_region
          %249 = dma.done [#allocation3], 512
        $region48: #{tpu_custom_call.1} parent=43 // pred_fallthru
          _
        %s250 = smul.u32 2, %s21
        %p251 = scmp.lt.s32.totalorder %s250, 3
        %s252 = scalar_select %p251, %s250, 3
        %s253 = smul.addr %s252, 8
        %s254 = scalar_lea.vmem %s0, %s253
        %p255 = pneg %p42
        %p256 = pneg %p39
        %s257 = smul.u32 2, %s21
        %p258 = scmp.lt.s32.totalorder %s257, 3
        %s259 = scalar_select %p258, %s257, 3
        %s260 = smul.addr %s259, 8
        %s261 = scalar_lea.vmem %s1, %s260
        %p262 = pneg %p68
        %p263 = pneg %p65
        %p264 = pneg %p89
        %p265 = pneg %p86
        %p266 = pneg %p110
        %p267 = pneg %p107
        %p268 = pneg %p131
        %p269 = pneg %p128
        %p270 = pneg %p152
        %p271 = pneg %p149
        %p272 = pneg %p178
        %p273 = pneg %p175
        %s274 = sand.u32 %s165, 1
        %s275 = scalar_lea.sflag [#allocation4], %s274
        %s276 = sand.u32 %s165, 1
        %s277 = smul.addr %s276, 16
        %s278 = scalar_lea.vmem [#allocation5], %s277
        %s279 = smul.u32 2, %s21
        %p280 = scmp.lt.s32.totalorder %s279, 3
        %s281 = scalar_select %p280, %s279, 3
        %s282 = smul.addr %s281, 8
        %s283 = scalar_lea.vmem %s0, %s282
        %s284 = smul.u32 2, %s21
        %s285 = smul.u32 2, %s21
        %p286 = scmp.lt.s32.totalorder %s285, 3
        %s287 = scalar_select %p286, %s285, 3
        %s288 = smul.addr %s287, 8
        %s289 = scalar_lea.vmem %s1, %s288
        %s290 = smul.u32 2, %s21
        %s291 = smul.u32 2, %s21
        %v293 = vld [vmem:[%s283] sm:$0xff]
        %v294 = vld [vmem:[%s283 + $0x8] sm:$0xff]
        %v295 = vld [vmem:[%s289] sm:$0xff]
        %v296 = vld [vmem:[%s289 + $0x8] sm:$0xff]
        %vm297 = vcmask 64512
        %v298 = vsel %vm297, %v293, 0.0
        %299 = vadd.xlane.f32.xlu0 %v298
        %v300 = vpop.xlane.xlu0 %299
        %v301 = vsel %vm297, %v294, 0.0
        %302 = vadd.xlane.f32.xlu0 %v301
        %v303 = vpop.xlane.xlu0 %302
        %vm304 = vcmp.eq.f32.partialorder %v300, 0.0
        %vm305 = vcmp.eq.f32.partialorder %v303, 0.0
        %v306 = vsel %vm304, 1e-10, %v300
        %v307 = vsel %vm305, 1e-10, %v303
        %v308 = vrsqrt.pop %v306
        %v309 = vmul.f32 %v308, %v306
        %v310 = vmul.f32 %v309, %v308
        %v311 = vmul.f32 0.5, %v310
        %v312 = vsub.f32 1.5, %v311
        %v313 = vmul.f32 %v308, %v312
        %vm314 = vweird.f32 %v306
        %vm315 = vweird.f32 %v308
        %vm316 = vmor %vm314, %vm315
        %v317 = vsel %vm316, %v308, %v313
        %v318 = vrsqrt.pop %v307
        %v319 = vmul.f32 %v318, %v307
        %v320 = vmul.f32 %v319, %v318
        %v321 = vmul.f32 0.5, %v320
        %v322 = vsub.f32 1.5, %v321
        %v323 = vmul.f32 %v318, %v322
        %vm324 = vweird.f32 %v307
        %vm325 = vweird.f32 %v318
        %vm326 = vmor %vm324, %vm325
        %v327 = vsel %vm326, %v318, %v323
        %v328 = vlaneseq
        %v329 = vshrl.u32 %v328, 7
        %v330 = vlaneseq
        %v331 = vand.u32 %v330, 127
        %vm332 = vcmp.eq.s32.totalorder %v329, %v331
        %v333 = vsel %vm332, 1, 0
        %v334 = vcvt.s32.f32 %v333
        %v335 = vrot.slane %v298, 4
        %v336 = vadd.f32 %v298, %v335
        %v337 = vrot.slane %v336, 2
        %v338 = vadd.f32 %v336, %v337
        %v339 = vrot.slane %v338, 1
        %v340 = vadd.f32 %v338, %v339
        %v341 = vmul.f32 %v334, %v340
        %v342 = vsel %vm297, %v341, 0.0
        %343 = vadd.xlane.f32.xlu0 %v342
        %v344 = vpop.xlane.xlu0 %343
        %v345 = vrot.slane %v301, 4
        %v346 = vadd.f32 %v301, %v345
        %v347 = vrot.slane %v346, 2
        %v348 = vadd.f32 %v346, %v347
        %v349 = vrot.slane %v348, 1
        %v350 = vadd.f32 %v348, %v349
        %v351 = vmul.f32 %v334, %v350
        %v352 = vsel %vm297, %v351, 0.0
        %353 = vadd.xlane.f32.xlu0 %v352
        %v354 = vpop.xlane.xlu0 %353
        %vm355 = vcmp.eq.f32.partialorder %v344, 0.0
        %vm356 = vcmp.eq.f32.partialorder %v354, 0.0
        %v357 = vsel %vm355, 1e-10, %v344
        %v358 = vsel %vm356, 1e-10, %v354
        %v359 = vrsqrt.pop %v357
        %v360 = vmul.f32 %v359, %v357
        %v361 = vmul.f32 %v360, %v359
        %v362 = vmul.f32 0.5, %v361
        %v363 = vsub.f32 1.5, %v362
        %v364 = vmul.f32 %v359, %v363
        %vm365 = vweird.f32 %v357
        %vm366 = vweird.f32 %v359
        %vm367 = vmor %vm365, %vm366
        %v368 = vsel %vm367, %v359, %v364
        %v369 = vrsqrt.pop %v358
        %v370 = vmul.f32 %v369, %v358
        %v371 = vmul.f32 %v370, %v369
        %v372 = vmul.f32 0.5, %v371
        %v373 = vsub.f32 1.5, %v372
        %v374 = vmul.f32 %v369, %v373
        %vm375 = vweird.f32 %v358
        %vm376 = vweird.f32 %v369
        %vm377 = vmor %vm375, %vm376
        %v378 = vsel %vm377, %v369, %v374
        %v379 = vpack.c.bf16 %v293, %v293
        %v380 = vpack.c.bf16 %v294, %v294
        %v381 = vld [vmem:[%s2] sm:$0xf]
        %v382 = vld [vmem:[%s3] sm:$0x1]
        %v383 = vmul.f32 %v295, %v317
        %v384 = vmul.f32 %v296, %v327
        %v385 = vpack.c.bf16 %v381, %v381
        %v386 = vpack.c.bf16 %v383, %v383
        %v387 = vpack.c.bf16 %v384, %v384
        %v389 = vsel %vm297, %v379, 0
        %vm391 = vcmask 1043456
        %v393 = vsel %vm391, %v386, 0
        %395 = vmatpush.bf16.msra.mxu0 0
        %396 = vmatpush.bf16.msra.mxu0 0
        %397 = vmatpush.bf16.msra.mxu0 0
        %398 = vmatpush.bf16.msra.mxu0 0
        %399 = vmatpush.bf16.msra.mxu0 0
        %400 = vmatpush.bf16.msra.mxu0 0
        %401 = vmatpush.bf16.msra.mxu0 0
        %402 = vmatpush.bf16.msra.mxu0 %v393
        %403 = vmatmul.bf16.gmra.mxu0 %v389
        %v404 = vpop.f32.mrf.mxu0
        %v405 = vadd.f32 0.0, %v404
        %v406 = vpop.f32.mrf.mxu0
        %407 = vdwg.mxu0
        %v409 = vsel %vm297, %v380, 0
        %v412 = vsel %vm391, %v387, 0
        %414 = vmatpush.bf16.msra.mxu0 0
        %415 = vmatpush.bf16.msra.mxu0 0
        %416 = vmatpush.bf16.msra.mxu0 0
        %417 = vmatpush.bf16.msra.mxu0 0
        %418 = vmatpush.bf16.msra.mxu0 0
        %419 = vmatpush.bf16.msra.mxu0 0
        %420 = vmatpush.bf16.msra.mxu0 0
        %421 = vmatpush.bf16.msra.mxu0 %v412
        %422 = vmatmul.bf16.gmra.mxu0 %v409
        %v423 = vpop.f32.mrf.mxu0
        %v424 = vadd.f32 0.0, %v423
        %v425 = vpop.f32.mrf.mxu0
        %426 = vdwg.mxu0
        %v427 = vpack.c.bf16 %v424, %v405
        %vm428 = vcmask 31744
        %v430 = vsel %vm428, %v427, 0
        %vm432 = vcmask 1041408
        %v434 = vsel %vm432, %v385, 0
        %436 = vmatpush.bf16.msra.mxu0 0
        %437 = vmatpush.bf16.msra.mxu0 0
        %438 = vmatpush.bf16.msra.mxu0 0
        %439 = vmatpush.bf16.msra.mxu0 0
        %440 = vmatpush.bf16.msra.mxu0 0
        %441 = vmatpush.bf16.msra.mxu0 0
        %442 = vmatpush.bf16.msra.mxu0 0
        %443 = vmatpush.bf16.msra.mxu0 %v434
        %444 = vmatmul.bf16.gmra.mxu0 %v430
        %v445 = vpop.f32.mrf.mxu0
        %v446 = vadd.f32 0.0, %v445
        %v447 = vpop.f32.mrf.mxu0
        %v448 = vadd.f32 0.0, %v447
        %449 = vdwg.mxu0
        %451 = vset.pattern.permute.xlu0 0
        %452 = vperm.xlu0 %451, %v368
        %v453 = vpop.permute.xlu0 %452
        %456 = vset.pattern.permute.xlu0 0
        %457 = vperm.xlu0 %456, %v378
        %v458 = vpop.permute.xlu0 %457
        %v460 = vmul.f32 %v446, %v453
        %v461 = vmul.f32 %v448, %v458
        %v462 = vmax.f32 %v460, 0.0
        %v463 = vmax.f32 %v461, 0.0
        %v465 = vperm.slane %v382, 0
        %v467 = vadd.f32 %v462, %v465
        %v468 = vadd.f32 %v463, %v465
        %v469 = vld [vmem:[#allocation2] sm:$0xff]
        %v470 = vld [vmem:[#allocation2 + $0x8] sm:$0xff]
        %v471 = vld [vmem:[#allocation2 + $0x10] sm:$0xff]
        %v472 = vld [vmem:[#allocation2 + $0x18] sm:$0xff]
        %v473 = vld [vmem:[%s5] sm:$0x1]
        %v474 = vmul.f32 %v467, %v317
        %v475 = vmul.f32 %v468, %v327
        %v476 = vpack.c.bf16 %v470, %v469
        %v477 = vpack.c.bf16 %v472, %v471
        %v478 = vpack.c.bf16 %v474, %v474
        %v479 = vpack.c.bf16 %v475, %v475
        %v481 = vsel %vm391, %v478, 0
        %483 = vmatpush.bf16.msra.mxu0 0
        %484 = vmatpush.bf16.msra.mxu0 0
        %485 = vmatpush.bf16.msra.mxu0 0
        %486 = vmatpush.bf16.msra.mxu0 0
        %487 = vmatpush.bf16.msra.mxu0 0
        %488 = vmatpush.bf16.msra.mxu0 0
        %489 = vmatpush.bf16.msra.mxu0 0
        %490 = vmatpush.bf16.msra.mxu0 %v481
        %491 = vmatmul.bf16.gmra.mxu0 %v389
        %v492 = vpop.f32.mrf.mxu0
        %v493 = vadd.f32 0.0, %v492
        %v494 = vpop.f32.mrf.mxu0
        %495 = vdwg.mxu0
        %v497 = vsel %vm391, %v479, 0
        %499 = vmatpush.bf16.msra.mxu0 0
        %500 = vmatpush.bf16.msra.mxu0 0
        %501 = vmatpush.bf16.msra.mxu0 0
        %502 = vmatpush.bf16.msra.mxu0 0
        %503 = vmatpush.bf16.msra.mxu0 0
        %504 = vmatpush.bf16.msra.mxu0 0
        %505 = vmatpush.bf16.msra.mxu0 0
        %506 = vmatpush.bf16.msra.mxu0 %v497
        %507 = vmatmul.bf16.gmra.mxu0 %v409
        %v508 = vpop.f32.mrf.mxu0
        %v509 = vadd.f32 0.0, %v508
        %v510 = vpop.f32.mrf.mxu0
        %511 = vdwg.mxu0
        %v512 = vpack.c.bf16 %v509, %v493
        %vm513 = vcmask 261120
        %v515 = vsel %vm513, %v512, 0
        %517 = vmatpush.bf16.msra.mxu0 0
        %518 = vmatpush.bf16.msra.mxu0 0
        %519 = vmatpush.bf16.msra.mxu0 0
        %520 = vmatpush.bf16.msra.mxu0 0
        %521 = vmatpush.bf16.msra.mxu0 0
        %522 = vmatpush.bf16.msra.mxu0 0
        %523 = vmatpush.bf16.msra.mxu0 %v477
        %524 = vmatpush.bf16.msra.mxu0 %v476
        %525 = vmatmul.bf16.gmra.mxu0 %v515
        %v526 = vpop.f32.mrf.mxu0
        %v527 = vadd.f32 0.0, %v526
        %v528 = vpop.f32.mrf.mxu0
        %v529 = vadd.f32 0.0, %v528
        %530 = vdwg.mxu0
        %v531 = vmul.f32 %v527, %v453
        %v532 = vmul.f32 %v529, %v458
        %v533 = vmax.f32 %v531, 0.0
        %v534 = vmax.f32 %v532, 0.0
        %v536 = vperm.slane %v473, 0
        %v538 = vadd.f32 %v533, %v536
        %v539 = vadd.f32 %v534, %v536
        %540 = vst [vmem:[%s278] sm:$0xff] %v538
        %541 = vst [vmem:[%s278 + $0x8] sm:$0xff] %v539
        %s542 = sand.u32 %s165, 1
        %s543 = scalar_lea.sflag [#allocation4], %s542
        %s544 = sand.u32 %s165, 1
        %s545 = smul.addr %s544, 16
        %s546 = scalar_lea.vmem [#allocation5], %s545
        // Predicated region
        $region49: #{tpu_custom_call.1} parent=43 // pred_check
          %p547 = pneg %p175
        $region50: #{tpu_custom_call.1} parent=43 // pred_check_branch
          %549 = sbr.rel (%p547) target = $region52
        $region51: #{tpu_custom_call.1} parent=43 // pred_region
          %s550 = smul.u32 2, %s21
          %552 = vsyncadd %s543, 0
          %s553 = smul.addr %s550, 8
          %s554 = scalar_lea.hbm %s6, %s553
          %s555 = sshll.u32 %s546, 4
          %s556 = int_to_ptr.vmem [resolvable:$true] %s555
          %s557 = sshll.u32 %s554, 4
          %s558 = int_to_ptr.hbm [resolvable:$true] %s557
          %563 = dma.vmem_to_hbm [thread:$0]  %s556, 256, %s558, %s543, 128, 128, 8
        $region52: #{tpu_custom_call.1} parent=43 // pred_fallthru
          _
      $region44: #{tpu_custom_call.1} parent=5 // pred_fallthru
        _
      %p564 = scmp.le.s32.totalorder 2, %s16
      // Predicated region
      $region53: #{tpu_custom_call.1} parent=5 // pred_check
        %p565 = pneg %p564
      $region54: #{tpu_custom_call.1} parent=5 // pred_check_branch
        %567 = sbr.rel (%p565) target = $region56
      $region55: #{tpu_custom_call.1} parent=5 // pred_region
        %s568 = ssub.s32 %s16, 2
        // Predicated region
        $region57: #{tpu_custom_call.1} parent=55 // pred_check
          %p569 = pneg %p181
        $region58: #{tpu_custom_call.1} parent=55 // pred_check_branch
          %571 = sbr.rel (%p569) target = $region60
        $region59: #{tpu_custom_call.1} parent=55 // pred_region
          %s572 = sand.u32 %s166, 1
          %s573 = scalar_lea.sflag [#allocation4], %s572
          %s574 = sand.u32 %s166, 1
          %s575 = smul.addr %s574, 16
          %s576 = scalar_lea.vmem [#allocation5], %s575
          %578 = dma.done %s573, 256
        $region60: #{tpu_custom_call.1} parent=55 // pred_fallthru
          _
      $region56: #{tpu_custom_call.1} parent=5 // pred_fallthru
        _
    $region6: #{tpu_custom_call.1} parent=1 // loop_footer
      %s20 = sadd.s32 1, %s16
    $region7: #{tpu_custom_call.1} parent=1 // loop_footer_branch
      %15 = sbr.rel target = $region3
    $region8: #{tpu_custom_call.1} parent=1 // loop_exit
      _
    %579 = vsyncpa [#allocation3], 1
    %s580 = scalar_lea.sflag [#allocation3], 1
    %581 = vsyncpa %s580, 1
    %582 = vsyncpa [#allocation4], 1
    %s583 = scalar_lea.sflag [#allocation4], 1
    %584 = vsyncpa %s583, 1

</llo_original>
